<compile_context>
chip_gen: v5e
topology: v5e:2x2
jax: 0.10.0
libtpu: 0.0.40
codegen_flags: <defaults>
</compile_context>

<pallas_src>
import functools

import jax
import jax.numpy as jnp
from jax import lax
from jax.experimental import pallas as pl
from jax.experimental.pallas import tpu as pltpu


def _contrastive_kernel(feat_ref, lab_ref, invf_ref, cfeat_ref, clab_ref,
                        invc_ref, logden_ref, logpos_ref, den_acc, pos_acc,
                        *, zero_diag, n_total, tile_b, tile_n, padded_n):
    k = pl.program_id(1)                      # contrast-tile (reduction) index

    @pl.when(k == 0)
    def _init():
        den_acc[...] = jnp.zeros_like(den_acc)
        pos_acc[...] = jnp.zeros_like(pos_acc)

    # Native-dtype operands straight into the MXU, f32 accumulation.
    raw = lax.dot_general(
        feat_ref[...], cfeat_ref[...],
        dimension_numbers=(((1,), (1,)), ((), ())),
        preferred_element_type=jnp.float32)                     # [tb, tn]

    # Post-matmul rank-1 rescale: resident row inv-norms x lane-major column
    # inv-norms (1/temperature already folded in).  No transposes.
    sim = raw * invf_ref[...] * invc_ref[...]                   # [tb, tn]
    e = jnp.exp(sim)

    if padded_n or zero_diag:
        col = lax.broadcasted_iota(jnp.int32, (tile_b, tile_n), 1) + k * tile_n
    if padded_n:
        # Zero padded contrast columns BEFORE both row sums (den and pos).
        e = jnp.where(col < n_total, e, 0.0)

    eq = lab_ref[...] == clab_ref[...]                          # [tb,1]==[1,tn]
    if zero_diag:
        row = (lax.broadcasted_iota(jnp.int32, (tile_b, tile_n), 0)
               + pl.program_id(0) * tile_b)
        eq = jnp.logical_and(eq, row != col)                    # fused diag removal

    den_acc[...] += jnp.sum(e, axis=1, keepdims=True)
    pos_acc[...] += jnp.sum(jnp.where(eq, e, 0.0), axis=1, keepdims=True)

    @pl.when(k == pl.num_programs(1) - 1)
    def _finalize():
        # Log-space partials: 2*tb transcendentals instead of tb * B.
        logden_ref[...] = jnp.log(den_acc[...])
        logpos_ref[...] = jnp.log(pos_acc[...])   # log(0) -> -inf handled outside


def _round_up(x, m):
    return ((x + m - 1) // m) * m


def _sublane(dtype):
    # Sublane packing granularity: 8 rows (32-bit), 16 (16-bit), 32 (8-bit).
    return max(8, 32 // jnp.dtype(dtype).itemsize)


def contrastive_learning_loss(features, labels,
                              all_features=None, all_labels=None,
                              temperature=0.07, tile_b=256, tile_n=1024):
    """JAX/Pallas equivalent of ContrastiveLearningLoss.forward."""
    if all_features is None or all_labels is None:
        contrast_features, contrast_labels, zero_diag = features, labels, True
    else:
        contrast_features, contrast_labels, zero_diag = all_features, all_labels, False

    B, D = features.shape
    N = contrast_features.shape[0]
    f32 = jnp.float32

    # ---- tile selection ------------------------------------------------------
    tb = _round_up(min(int(tile_b), B), _sublane(features.dtype))
    tn = _round_up(min(int(tile_n), N), _sublane(contrast_features.dtype))
    if tn < N:
        # Multi-tile contrast axis: the lane-major (1, tn) label/norm blocks
        # need tn % 128 == 0 (also MXU-width friendly).
        tn = _round_up(tn, 128)
    b_pad = _round_up(B, tb)
    n_pad = _round_up(N, tn)
    padded_n = n_pad != N

    # ---- inverse norms hoisted out of the per-tile loop ----------------------
    # Matches F.normalize semantics: x / max(||x||, 1e-12).
    inv_f = 1.0 / jnp.maximum(
        jnp.linalg.norm(features.astype(f32), axis=1, keepdims=True), 1e-12)   # [B,1]
    inv_c = 1.0 / jnp.maximum(
        jnp.linalg.norm(contrast_features.astype(f32), axis=1), 1e-12)          # [N]
    inv_c = (inv_c / float(temperature)).reshape(1, N)        # fold 1/T, lane-major

    lab = labels.reshape(B, 1).astype(jnp.int32)
    clab = contrast_labels.reshape(1, N).astype(jnp.int32)

    # ---- pad to tile multiples (cols masked in-kernel, rows sliced after) ----
    feat_p = jnp.pad(features, ((0, b_pad - B), (0, 0)))
    lab_p = jnp.pad(lab, ((0, b_pad - B), (0, 0)))
    invf_p = jnp.pad(inv_f, ((0, b_pad - B), (0, 0)))
    cfeat_p = jnp.pad(contrast_features, ((0, n_pad - N), (0, 0)))
    clab_p = jnp.pad(clab, ((0, 0), (0, n_pad - N)))
    invc_p = jnp.pad(inv_c, ((0, 0), (0, n_pad - N)))

    kernel = functools.partial(
        _contrastive_kernel,
        zero_diag=zero_diag, n_total=int(N),
        tile_b=int(tb), tile_n=int(tn), padded_n=padded_n)

    grid = (b_pad // tb, n_pad // tn)
    fbytes = jnp.dtype(features.dtype).itemsize
    cbytes = jnp.dtype(contrast_features.dtype).itemsize
    cost = pl.CostEstimate(
        flops=int(2 * b_pad * n_pad * D),
        transcendentals=int(b_pad * n_pad),
        bytes_accessed=int(b_pad * D * fbytes
                           + grid[0] * n_pad * (D * cbytes + 8)
                           + b_pad * 16))

    log_den, log_pos = pl.pallas_call(
        kernel,
        out_shape=(jax.ShapeDtypeStruct((b_pad, 1), f32),
                   jax.ShapeDtypeStruct((b_pad, 1), f32)),
        grid=grid,
        in_specs=[
            pl.BlockSpec((tb, D), lambda b, k: (b, 0)),   # anchor features
            pl.BlockSpec((tb, 1), lambda b, k: (b, 0)),   # anchor labels
            pl.BlockSpec((tb, 1), lambda b, k: (b, 0)),   # anchor inv norms
            pl.BlockSpec((tn, D), lambda b, k: (k, 0)),   # contrast feature tile
            pl.BlockSpec((1, tn), lambda b, k: (0, k)),   # contrast labels (lane-major)
            pl.BlockSpec((1, tn), lambda b, k: (0, k)),   # contrast inv norms / T
        ],
        out_specs=(pl.BlockSpec((tb, 1), lambda b, k: (b, 0)),
                   pl.BlockSpec((tb, 1), lambda b, k: (b, 0))),
        scratch_shapes=[pltpu.VMEM((tb, 1), f32),         # running denominator
                        pltpu.VMEM((tb, 1), f32)],        # running positive sum
        compiler_params=pltpu.CompilerParams(
            dimension_semantics=("parallel", "arbitrary")),
        cost_estimate=cost,
    )(feat_p, lab_p, invf_p, cfeat_p, clab_p, invc_p)

    # Tiny epilogue reproducing the PyTorch [B] / [B,1] broadcast quirk:
    #   pos_term[i, j] = pos_sum[j] / den[i], clamp(1e-8), -log, mean
    # in log space: min(log(den_i) - log(pos_j), -log(1e-8)).  Rows with no
    # positives give log(pos) = -inf -> the min lands exactly on the clamp.
    ld = log_den[:B, 0]
    lp = log_pos[:B, 0]
    clip = -jnp.log(jnp.float32(1e-8))
    return jnp.mean(jnp.minimum(ld[:, None] - lp[None, :], clip))


def _reference_loss(features, labels, contrast_features, contrast_labels,
                    temperature, zero_diag):
    # Pure-JAX mirror of the PyTorch forward (incl. the [B]/[B,1] broadcast).
    f = features.astype(jnp.float32)
    cf = contrast_features.astype(jnp.float32)
    f = f / jnp.maximum(jnp.linalg.norm(f, axis=1, keepdims=True), 1e-12)
    cf = cf / jnp.maximum(jnp.linalg.norm(cf, axis=1, keepdims=True), 1e-12)
    # Exact f32 similarity (no MXU) so the test is independent of matmul precision.
    sim = (f[:, None, :] * cf[None, :, :]).sum(-1) / temperature
    mask = (labels[:, None] == contrast_labels[None, :]).astype(jnp.float32)
    if zero_diag:
        mask = mask * (1.0 - jnp.eye(f.shape[0], dtype=jnp.float32))
    exp_sim = jnp.exp(sim)
    den = exp_sim.sum(axis=1, keepdims=True)                  # [B,1]
    pos_sum = (exp_sim * mask).sum(axis=1)                    # [B]
    pos_term = jnp.maximum(pos_sum[None, :] / den, 1e-8)      # [B,B]
    return jnp.mean(-jnp.log(pos_term))


if __name__ == "__main__":
    key = jax.random.PRNGKey(0)
    kf, kl, kaf, kal = jax.random.split(key, 4)

    B, D = 10, 32
    features = jax.random.normal(kf, (B, D), dtype=jnp.float32)
    labels = jax.random.randint(kl, (B,), 0, 4, dtype=jnp.int32)

    # Case 1: self-contrast (diagonal removed), single tile, padded rows/cols.
    loss1 = jax.block_until_ready(
        contrastive_learning_loss(features, labels, temperature=0.07))
    ref1 = jax.block_until_ready(
        _reference_loss(features, labels, features, labels, 0.07, True))
    assert jnp.allclose(loss1, ref1, rtol=2e-2, atol=2e-2), (loss1, ref1)

    # Case 2: cross-client contrast, grid = (2 anchor blocks, 3 contrast tiles)
    #         with a masked tail (N=300 padded to 384).
    N = 300
    all_features = jax.random.normal(kaf, (N, D), dtype=jnp.float32)
    all_labels = jax.random.randint(kal, (N,), 0, 4, dtype=jnp.int32)
    loss2 = jax.block_until_ready(
        contrastive_learning_loss(features, labels, all_features, all_labels,
                                  temperature=0.07, tile_b=8, tile_n=128))
    ref2 = jax.block_until_ready(
        _reference_loss(features, labels, all_features, all_labels, 0.07, False))
    assert jnp.allclose(loss2, ref2, rtol=2e-2, atol=2e-2), (loss2, ref2)

    print("KERNEL_OK")
</pallas_src>

<mosaic_0001>
module attributes {stable_mosaic.version = 11 : i64} {
  func.func @_contrastive_kernel(%arg0: i32, %arg1: i32, %arg2: memref<16x32xf32, #tpu.memory_space<vmem>>, %arg3: memref<16x1xi32, #tpu.memory_space<vmem>>, %arg4: memref<16x1xf32, #tpu.memory_space<vmem>>, %arg5: memref<16x32xf32, #tpu.memory_space<vmem>>, %arg6: memref<1x16xi32, #tpu.memory_space<vmem>>, %arg7: memref<1x16xf32, #tpu.memory_space<vmem>>, %arg8: memref<16x1xf32, #tpu.memory_space<vmem>>, %arg9: memref<16x1xf32, #tpu.memory_space<vmem>>, %arg10: memref<16x1xf32, #tpu.memory_space<vmem>>, %arg11: memref<16x1xf32, #tpu.memory_space<vmem>>) attributes {dimension_semantics = [#tpu.dimension_semantics<parallel>, #tpu.dimension_semantics<arbitrary>], iteration_bounds = array<i64: 1, 1>, scalar_prefetch = 0 : i64, scratch_operands = 2 : i64, tpu.core_type = #tpu.core_type<tc>, window_params = [{transform_indices = @transform_0, window_bounds = array<i64: 16, 32>}, {transform_indices = @transform_1, window_bounds = array<i64: 16, 1>}, {transform_indices = @transform_2, window_bounds = array<i64: 16, 1>}, {transform_indices = @transform_3, window_bounds = array<i64: 16, 32>}, {transform_indices = @transform_4, window_bounds = array<i64: 1, 16>}, {transform_indices = @transform_5, window_bounds = array<i64: 1, 16>}, {transform_indices = @transform_6, window_bounds = array<i64: 16, 1>}, {transform_indices = @transform_7, window_bounds = array<i64: 16, 1>}]} {
    %c0_i32 = arith.constant 0 : i32
    %0 = arith.cmpi eq, %arg1, %c0_i32 : i32
    %1 = arith.extui %0 : i1 to i32
    %c0_i32_0 = arith.constant 0 : i32
    %2 = arith.cmpi ne, %1, %c0_i32_0 : i32
    scf.if %2 {
      %cst_27 = arith.constant 0.000000e+00 : f32
      %47 = vector.broadcast %cst_27 : f32 to vector<16x1xf32>
      %c0_28 = arith.constant 0 : index
      %c0_29 = arith.constant 0 : index
      %48 = vector.load %arg10[%c0_28, %c0_29] : memref<16x1xf32, #tpu.memory_space<vmem>>, vector<16x1xf32>
      tpu.vector_store %arg10[%c0_28, %c0_29], %47 {strides = array<i32>} : memref<16x1xf32, #tpu.memory_space<vmem>>, vector<16x1xf32>,
      %cst_30 = arith.constant 0.000000e+00 : f32
      %49 = vector.broadcast %cst_30 : f32 to vector<16x1xf32>
      %c0_31 = arith.constant 0 : index
      %c0_32 = arith.constant 0 : index
      %50 = vector.load %arg11[%c0_31, %c0_32] : memref<16x1xf32, #tpu.memory_space<vmem>>, vector<16x1xf32>
      tpu.vector_store %arg11[%c0_31, %c0_32], %49 {strides = array<i32>} : memref<16x1xf32, #tpu.memory_space<vmem>>, vector<16x1xf32>,
    } else {
    }
    %c0 = arith.constant 0 : index
    %c0_1 = arith.constant 0 : index
    %3 = vector.load %arg2[%c0, %c0_1] : memref<16x32xf32, #tpu.memory_space<vmem>>, vector<16x32xf32>
    %c0_2 = arith.constant 0 : index
    %c0_3 = arith.constant 0 : index
    %4 = vector.load %arg5[%c0_2, %c0_3] : memref<16x32xf32, #tpu.memory_space<vmem>>, vector<16x32xf32>
    %cst = arith.constant dense<0.000000e+00> : vector<16x16xf32>
    %5 = tpu.matmul %3, %4, %cst {dimension_numbers = #tpu.dot_dimension_numbers<[1], [1], [0], [0], [0, 0, 1, 0], [], []>} : vector<16x32xf32>, vector<16x32xf32>, vector<16x16xf32> -> vector<16x16xf32>
    %c0_4 = arith.constant 0 : index
    %c0_5 = arith.constant 0 : index
    %6 = vector.load %arg4[%c0_4, %c0_5] : memref<16x1xf32, #tpu.memory_space<vmem>>, vector<16x1xf32>
    %7 = vector.broadcast %6 : vector<16x1xf32> to vector<16x16xf32>
    %8 = arith.mulf %5, %7 : vector<16x16xf32>
    %c0_6 = arith.constant 0 : index
    %c0_7 = arith.constant 0 : index
    %9 = vector.load %arg7[%c0_6, %c0_7] : memref<1x16xf32, #tpu.memory_space<vmem>>, vector<1x16xf32>
    %10 = vector.broadcast %9 : vector<1x16xf32> to vector<16x16xf32>
    %11 = arith.mulf %8, %10 : vector<16x16xf32>
    %12 = math.exp %11 : vector<16x16xf32>
    %13 = tpu.iota {dimensions = array<i32: 1>} : vector<16x16xi32>
    %c16_i32 = arith.constant 16 : i32
    %14 = arith.muli %arg1, %c16_i32 : i32
    %15 = vector.broadcast %14 : i32 to vector<16x16xi32>
    %16 = arith.addi %13, %15 : vector<16x16xi32>
    %c10_i32 = arith.constant 10 : i32
    %17 = vector.broadcast %c10_i32 : i32 to vector<16x16xi32>
    %18 = arith.cmpi slt, %16, %17 : vector<16x16xi32>
    %cst_8 = arith.constant 0.000000e+00 : f32
    %19 = vector.broadcast %cst_8 : f32 to vector<16x16xf32>
    %20 = arith.select %18, %12, %19 : vector<16x16xi1>, vector<16x16xf32>
    %c0_9 = arith.constant 0 : index
    %c0_10 = arith.constant 0 : index
    %21 = vector.load %arg3[%c0_9, %c0_10] : memref<16x1xi32, #tpu.memory_space<vmem>>, vector<16x1xi32>
    %c0_11 = arith.constant 0 : index
    %c0_12 = arith.constant 0 : index
    %22 = vector.load %arg6[%c0_11, %c0_12] : memref<1x16xi32, #tpu.memory_space<vmem>>, vector<1x16xi32>
    %23 = vector.broadcast %21 : vector<16x1xi32> to vector<16x16xi32>
    %24 = vector.broadcast %22 : vector<1x16xi32> to vector<16x16xi32>
    %25 = arith.cmpi eq, %23, %24 : vector<16x16xi32>
    %26 = tpu.iota {dimensions = array<i32: 0>} : vector<16x16xi32>
    %c16_i32_13 = arith.constant 16 : i32
    %27 = arith.muli %arg0, %c16_i32_13 : i32
    %28 = vector.broadcast %27 : i32 to vector<16x16xi32>
    %29 = arith.addi %26, %28 : vector<16x16xi32>
    %30 = arith.cmpi ne, %29, %16 : vector<16x16xi32>
    %31 = arith.andi %25, %30 : vector<16x16xi1>
    %c0_14 = arith.constant 0 : index
    %c0_15 = arith.constant 0 : index
    %32 = vector.load %arg10[%c0_14, %c0_15] : memref<16x1xf32, #tpu.memory_space<vmem>>, vector<16x1xf32>
    %cst_16 = arith.constant dense<0.000000e+00> : vector<16xf32>
    %33 = vector.multi_reduction <add>, %20, %cst_16 [1] : vector<16x16xf32> to vector<16xf32>
    %34 = vector.shape_cast %33 : vector<16xf32> to vector<16x1xf32>
    %35 = arith.addf %32, %34 : vector<16x1xf32>
    %c0_17 = arith.constant 0 : index
    %c0_18 = arith.constant 0 : index
    %36 = vector.load %arg10[%c0_17, %c0_18] : memref<16x1xf32, #tpu.memory_space<vmem>>, vector<16x1xf32>
    tpu.vector_store %arg10[%c0_17, %c0_18], %35 {strides = array<i32>} : memref<16x1xf32, #tpu.memory_space<vmem>>, vector<16x1xf32>,
    %c0_19 = arith.constant 0 : index
    %c0_20 = arith.constant 0 : index
    %37 = vector.load %arg11[%c0_19, %c0_20] : memref<16x1xf32, #tpu.memory_space<vmem>>, vector<16x1xf32>
    %cst_21 = arith.constant 0.000000e+00 : f32
    %38 = vector.broadcast %cst_21 : f32 to vector<16x16xf32>
    %39 = arith.select %31, %20, %38 : vector<16x16xi1>, vector<16x16xf32>
    %cst_22 = arith.constant dense<0.000000e+00> : vector<16xf32>
    %40 = vector.multi_reduction <add>, %39, %cst_22 [1] : vector<16x16xf32> to vector<16xf32>
    %41 = vector.shape_cast %40 : vector<16xf32> to vector<16x1xf32>
    %42 = arith.addf %37, %41 : vector<16x1xf32>
    %c0_23 = arith.constant 0 : index
    %c0_24 = arith.constant 0 : index
    %43 = vector.load %arg11[%c0_23, %c0_24] : memref<16x1xf32, #tpu.memory_space<vmem>>, vector<16x1xf32>
    tpu.vector_store %arg11[%c0_23, %c0_24], %42 {strides = array<i32>} : memref<16x1xf32, #tpu.memory_space<vmem>>, vector<16x1xf32>,
    %c0_i32_25 = arith.constant 0 : i32
    %44 = arith.cmpi eq, %arg1, %c0_i32_25 : i32
    %45 = arith.extui %44 : i1 to i32
    %c0_i32_26 = arith.constant 0 : i32
    %46 = arith.cmpi ne, %45, %c0_i32_26 : i32
    scf.if %46 {
      %c0_27 = arith.constant 0 : index
      %c0_28 = arith.constant 0 : index
      %47 = vector.load %arg10[%c0_27, %c0_28] : memref<16x1xf32, #tpu.memory_space<vmem>>, vector<16x1xf32>
      %48 = math.log %47 : vector<16x1xf32>
      %c0_29 = arith.constant 0 : index
      %c0_30 = arith.constant 0 : index
      %49 = vector.load %arg8[%c0_29, %c0_30] : memref<16x1xf32, #tpu.memory_space<vmem>>, vector<16x1xf32>
      tpu.vector_store %arg8[%c0_29, %c0_30], %48 {strides = array<i32>} : memref<16x1xf32, #tpu.memory_space<vmem>>, vector<16x1xf32>,
      %c0_31 = arith.constant 0 : index
      %c0_32 = arith.constant 0 : index
      %50 = vector.load %arg11[%c0_31, %c0_32] : memref<16x1xf32, #tpu.memory_space<vmem>>, vector<16x1xf32>
      %51 = math.log %50 : vector<16x1xf32>
      %c0_33 = arith.constant 0 : index
      %c0_34 = arith.constant 0 : index
      %52 = vector.load %arg9[%c0_33, %c0_34] : memref<16x1xf32, #tpu.memory_space<vmem>>, vector<16x1xf32>
      tpu.vector_store %arg9[%c0_33, %c0_34], %51 {strides = array<i32>} : memref<16x1xf32, #tpu.memory_space<vmem>>, vector<16x1xf32>,
    } else {
    }
    return
  }
  func.func @transform_0(%arg0: i32, %arg1: i32) -> (i32, i32) {
    %c0_i32 = arith.constant 0 : i32
    %c0_i32_0 = arith.constant 0 : i32
    return %arg0, %c0_i32 : i32, i32
  }
  func.func @transform_1(%arg0: i32, %arg1: i32) -> (i32, i32) {
    %c0_i32 = arith.constant 0 : i32
    %c0_i32_0 = arith.constant 0 : i32
    return %arg0, %c0_i32 : i32, i32
  }
  func.func @transform_2(%arg0: i32, %arg1: i32) -> (i32, i32) {
    %c0_i32 = arith.constant 0 : i32
    %c0_i32_0 = arith.constant 0 : i32
    return %arg0, %c0_i32 : i32, i32
  }
  func.func @transform_3(%arg0: i32, %arg1: i32) -> (i32, i32) {
    %c0_i32 = arith.constant 0 : i32
    %c0_i32_0 = arith.constant 0 : i32
    return %arg1, %c0_i32 : i32, i32
  }
  func.func @transform_4(%arg0: i32, %arg1: i32) -> (i32, i32) {
    %c0_i32 = arith.constant 0 : i32
    %c0_i32_0 = arith.constant 0 : i32
    return %c0_i32, %arg1 : i32, i32
  }
  func.func @transform_5(%arg0: i32, %arg1: i32) -> (i32, i32) {
    %c0_i32 = arith.constant 0 : i32
    %c0_i32_0 = arith.constant 0 : i32
    return %c0_i32, %arg1 : i32, i32
  }
  func.func @transform_6(%arg0: i32, %arg1: i32) -> (i32, i32) {
    %c0_i32 = arith.constant 0 : i32
    %c0_i32_0 = arith.constant 0 : i32
    return %arg0, %c0_i32 : i32, i32
  }
  func.func @transform_7(%arg0: i32, %arg1: i32) -> (i32, i32) {
    %c0_i32 = arith.constant 0 : i32
    %c0_i32_0 = arith.constant 0 : i32
    return %arg0, %c0_i32 : i32, i32
  }
}

</mosaic_0001>

<llo_original>
// kernel: tpu_custom_call.1
$region0: #{tpu_custom_call.1}
  #allocation0 [shape = 'u32[]', space=smem, size = 0x4, offset = 0x4, fixed_abs, tag = 'smem constant byte address 0x4 - core index']
  #allocation1 [shape = 'u32[72,128]{1,0:T(1,128)}', space=vmem, size = 0x9000, scoped, tag = 'internal scratch']
  #allocation2 [shape = 'f32[16,1]{1,0:T(8,128)}', space=vmem, size = 0x2000, scoped, tag = 'scratch operand']
  #allocation3 [shape = 'f32[16,1]{1,0:T(8,128)}', space=vmem, size = 0x2000, scoped, tag = 'scratch operand']
  %s0 = inlined_call_operand.vmem [shape: f32[16,32], index: 0, kind: input, shape index: {}]
  %s1 = inlined_call_operand.vmem [shape: s32[16,1], index: 1, kind: input, shape index: {}]
  %s2 = inlined_call_operand.vmem [shape: f32[16,1], index: 2, kind: input, shape index: {}]
  %s3 = inlined_call_operand.vmem [shape: f32[16,32], index: 3, kind: input, shape index: {}]
  %s4 = inlined_call_operand.vmem [shape: s32[1,16], index: 4, kind: input, shape index: {}]
  %s5 = inlined_call_operand.vmem [shape: f32[1,16], index: 5, kind: input, shape index: {}]
  %s6 = inlined_call_operand.vmem [shape: f32[16,1], index: 6, kind: output, shape index: {0}]
  %s7 = inlined_call_operand.vmem [shape: f32[16,1], index: 7, kind: output, shape index: {1}]
  %8 = xla_tuple %s6, %s7
  %s9 = sld [smem:[#allocation0]]
  $region50: #{tpu_custom_call.1} parent=0
    _
  %s11 = ssub.s32 1, %s9
  %s12 = scalar_select 0, %s11, %s9
  // Predicated region
  $region2: #{tpu_custom_call.1} parent=0 // pred_check
    _
  $region3: #{tpu_custom_call.1} parent=0 // pred_check_branch
    %14 = sbr.rel (0) target = $region5
  $region4: #{tpu_custom_call.1} parent=0 // pred_region
    _
  $region5: #{tpu_custom_call.1} parent=0 // pred_fallthru
    _
  // Predicated region
  $region6: #{tpu_custom_call.1} parent=0 // pred_check
    _
  $region7: #{tpu_custom_call.1} parent=0 // pred_check_branch
    %16 = sbr.rel (0) target = $region9
  $region8: #{tpu_custom_call.1} parent=0 // pred_region
    _
  $region9: #{tpu_custom_call.1} parent=0 // pred_fallthru
    _
  // Predicated region
  $region10: #{tpu_custom_call.1} parent=0 // pred_check
    _
  $region11: #{tpu_custom_call.1} parent=0 // pred_check_branch
    %18 = sbr.rel (0) target = $region13
  $region12: #{tpu_custom_call.1} parent=0 // pred_region
    _
  $region13: #{tpu_custom_call.1} parent=0 // pred_fallthru
    _
  // Predicated region
  $region14: #{tpu_custom_call.1} parent=0 // pred_check
    _
  $region15: #{tpu_custom_call.1} parent=0 // pred_check_branch
    %20 = sbr.rel (0) target = $region17
  $region16: #{tpu_custom_call.1} parent=0 // pred_region
    _
  $region17: #{tpu_custom_call.1} parent=0 // pred_fallthru
    _
  // Predicated region
  $region18: #{tpu_custom_call.1} parent=0 // pred_check
    _
  $region19: #{tpu_custom_call.1} parent=0 // pred_check_branch
    %22 = sbr.rel (0) target = $region21
  $region20: #{tpu_custom_call.1} parent=0 // pred_region
    _
  $region21: #{tpu_custom_call.1} parent=0 // pred_fallthru
    _
  // Predicated region
  $region22: #{tpu_custom_call.1} parent=0 // pred_check
    _
  $region23: #{tpu_custom_call.1} parent=0 // pred_check_branch
    %24 = sbr.rel (0) target = $region25
  $region24: #{tpu_custom_call.1} parent=0 // pred_region
    _
  $region25: #{tpu_custom_call.1} parent=0 // pred_fallthru
    _
  %p25 = scmp.eq.s32.totalorder 0, 0
  // Predicated region
  $region26: #{tpu_custom_call.1} parent=0 // pred_check
    %p26 = pneg %p25
  $region27: #{tpu_custom_call.1} parent=0 // pred_check_branch
    %28 = sbr.rel (%p26) target = $region29
  $region28: #{tpu_custom_call.1} parent=0 // pred_region
    %vm29 = vcmask 7168
    %30 = vst.msk [vmem:[#allocation2] sm:$0xff] %vm29, 0.0
    %31 = vst.msk [vmem:[#allocation2 + $0x8] sm:$0xff] %vm29, 0.0
    %32 = vst.msk [vmem:[#allocation3] sm:$0xff] %vm29, 0.0
    %33 = vst.msk [vmem:[#allocation3 + $0x8] sm:$0xff] %vm29, 0.0
  $region29: #{tpu_custom_call.1} parent=0 // pred_fallthru
    _
  %v34 = vld [vmem:[%s0] sm:$0xff]
  %v35 = vld [vmem:[%s0 + $0x8] sm:$0xff]
  %v36 = vld [vmem:[%s3] sm:$0xff]
  %v37 = vld [vmem:[%s3 + $0x8] sm:$0xff]
  %vm38 = vcmask 261120
  %v40 = vsel %vm38, %v34, 0
  %v43 = vsel %vm38, %v35, 0
  %v46 = vsel %vm38, %v36, 0
  %v49 = vsel %vm38, %v37, 0
  %51 = vmatpush.xpose.msra.mxu0 0.0
  %52 = vmatpush.xpose.msra.mxu0 0.0
  %53 = vmatpush.xpose.msra.mxu0 0.0
  %54 = vmatpush.xpose.msra.mxu0 0.0
  %55 = vmatpush.xpose.msra.mxu0 0.0
  %56 = vmatpush.xpose.msra.mxu0 0.0
  %57 = vmatpush.xpose.msra.mxu0 0.0
  %58 = vmatpush.xpose.msra.mxu0 0.0
  %59 = vmatpush.xpose.msra.mxu0 0.0
  %60 = vmatpush.xpose.msra.mxu0 0.0
  %61 = vmatpush.xpose.msra.mxu0 0.0
  %62 = vmatpush.xpose.msra.mxu0 0.0
  %63 = vmatpush.xpose.msra.mxu0 0.0
  %64 = vmatpush.xpose.msra.mxu0 0.0
  %65 = vmatpush.xpose.msra.mxu0 %v49
  %66 = vmatpush.xpose.msra.mxu0 %v46
  %67 = vmatmul.f32.gmra.mxu0 %v40
  %v68 = vpop.f32.mrf.mxu0
  %v69 = vadd.f32 0.0, %v68
  %70 = vmatmul.f32.gmra.mxu0 %v43
  %v71 = vpop.f32.mrf.mxu0
  %v72 = vadd.f32 0.0, %v71
  %73 = vdwg.mxu0
  %v74 = vld [vmem:[%s2] sm:$0xff]
  %v75 = vld [vmem:[%s2 + $0x8] sm:$0xff]
  %77 = vset.pattern.permute.xlu0 0
  %78 = vperm.xlu0 %77, %v74
  %v79 = vpop.permute.xlu0 %78
  %82 = vset.pattern.permute.xlu0 0
  %83 = vperm.xlu0 %82, %v75
  %v84 = vpop.permute.xlu0 %83
  %v86 = vmul.f32 %v69, %v79
  %v87 = vmul.f32 %v72, %v84
  %v88 = vld [vmem:[%s5] sm:$0x1]
  %v90 = vperm.slane %v88, 0
  %v92 = vmul.f32 %v86, %v90
  %v93 = vmul.f32 %v87, %v90
  %v94 = vmul.f32 %v92, 1.442695
  %v95 = vpow.pop %v94
  %v96 = vmul.f32 %v93, 1.442695
  %v97 = vpow.pop %v96
  %v98 = vlaneseq
  %v99 = vand.u32 %v98, 127
  %s100 = smul.u32 0, 16
  %v101 = vstv %s100
  %v102 = vadd.s32 %v99, %v101
  %vm103 = vcmp.lt.s32.totalorder %v102, 10
  %v104 = vsel %vm103, %v95, 0.0
  %v105 = vsel %vm103, %v97, 0.0
  %v106 = vld [vmem:[%s1] sm:$0xff]
  %v107 = vld [vmem:[%s1 + $0x8] sm:$0xff]
  %v108 = vld [vmem:[%s4] sm:$0x1]
  %109 = vset.pattern.permute.xlu0 0
  %110 = vperm.xlu0 %109, %v106
  %v111 = vpop.permute.xlu0 %110
  %112 = vset.pattern.permute.xlu0 0
  %113 = vperm.xlu0 %112, %v107
  %v114 = vpop.permute.xlu0 %113
  %v115 = vperm.slane %v108, 0
  %vm116 = vcmp.eq.s32.totalorder %v111, %v115
  %vm117 = vcmp.eq.s32.totalorder %v114, %v115
  %v118 = vlaneseq
  %v119 = vshrl.u32 %v118, 7
  %v120 = vadd.s32 %v119, 8
  %s121 = smul.u32 0, 16
  %v122 = vstv %s121
  %v123 = vadd.s32 %v119, %v122
  %v124 = vadd.s32 %v120, %v122
  %vm125 = vcmp.ne.s32.totalorder %v123, %v102
  %vm126 = vcmp.ne.s32.totalorder %v124, %v102
  %vm127 = vmand %vm116, %vm125
  %vm128 = vmand %vm117, %vm126
  %v129 = vld [vmem:[#allocation2] sm:$0xff]
  %v130 = vld [vmem:[#allocation2 + $0x8] sm:$0xff]
  %vm131 = vcmask 130048
  %v132 = vsel %vm131, %v104, 0.0
  %133 = vadd.xlane.f32.xlu0 %v132
  %v134 = vpop.xlane.xlu0 %133
  %v135 = vsel %vm131, %v105, 0.0
  %136 = vadd.xlane.f32.xlu0 %v135
  %v137 = vpop.xlane.xlu0 %136
  %v138 = vadd.f32 %v129, %v134
  %v139 = vadd.f32 %v130, %v137
  %vm140 = vcmask 7168
  %141 = vst.msk [vmem:[#allocation2] sm:$0xff] %vm140, %v138
  %142 = vst.msk [vmem:[#allocation2 + $0x8] sm:$0xff] %vm140, %v139
  %v143 = vld [vmem:[#allocation3] sm:$0xff]
  %v144 = vld [vmem:[#allocation3 + $0x8] sm:$0xff]
  %v145 = vsel %vm127, %v104, 0.0
  %v146 = vsel %vm128, %v105, 0.0
  %v147 = vsel %vm131, %v145, 0.0
  %148 = vadd.xlane.f32.xlu0 %v147
  %v149 = vpop.xlane.xlu0 %148
  %v150 = vsel %vm131, %v146, 0.0
  %151 = vadd.xlane.f32.xlu0 %v150
  %v152 = vpop.xlane.xlu0 %151
  %v153 = vadd.f32 %v143, %v149
  %v154 = vadd.f32 %v144, %v152
  %155 = vst.msk [vmem:[#allocation3] sm:$0xff] %vm140, %v153
  %156 = vst.msk [vmem:[#allocation3 + $0x8] sm:$0xff] %vm140, %v154
  // Predicated region
  $region30: #{tpu_custom_call.1} parent=0 // pred_check
    %p157 = pneg %p25
  $region31: #{tpu_custom_call.1} parent=0 // pred_check_branch
    %159 = sbr.rel (%p157) target = $region33
  $region32: #{tpu_custom_call.1} parent=0 // pred_region
    %v160 = vld [vmem:[#allocation2] sm:$0xff]
    %v161 = vld [vmem:[#allocation2 + $0x8] sm:$0xff]
    %v162 = vlog2.pop %v160
    %v163 = vmul.f32 %v162, 0.6931472
    %v164 = vlog2.pop %v161
    %v165 = vmul.f32 %v164, 0.6931472
    %166 = vst.msk [vmem:[%s6] sm:$0xff] %vm140, %v163
    %167 = vst.msk [vmem:[%s6 + $0x8] sm:$0xff] %vm140, %v165
    %v168 = vld [vmem:[#allocation3] sm:$0xff]
    %v169 = vld [vmem:[#allocation3 + $0x8] sm:$0xff]
    %v170 = vlog2.pop %v168
    %v171 = vmul.f32 %v170, 0.6931472
    %v172 = vlog2.pop %v169
    %v173 = vmul.f32 %v172, 0.6931472
    %174 = vst.msk [vmem:[%s7] sm:$0xff] %vm140, %v171
    %175 = vst.msk [vmem:[%s7 + $0x8] sm:$0xff] %vm140, %v173
  $region33: #{tpu_custom_call.1} parent=0 // pred_fallthru
    _
  // Predicated region
  $region34: #{tpu_custom_call.1} parent=0 // pred_check
    _
  $region35: #{tpu_custom_call.1} parent=0 // pred_check_branch
    %177 = sbr.rel (0) target = $region37
  $region36: #{tpu_custom_call.1} parent=0 // pred_region
    _
  $region37: #{tpu_custom_call.1} parent=0 // pred_fallthru
    _
  // Predicated region
  $region38: #{tpu_custom_call.1} parent=0 // pred_check
    _
  $region39: #{tpu_custom_call.1} parent=0 // pred_check_branch
    %179 = sbr.rel (0) target = $region41
  $region40: #{tpu_custom_call.1} parent=0 // pred_region
    _
  $region41: #{tpu_custom_call.1} parent=0 // pred_fallthru
    _
  // Predicated region
  $region42: #{tpu_custom_call.1} parent=0 // pred_check
    _
  $region43: #{tpu_custom_call.1} parent=0 // pred_check_branch
    %181 = sbr.rel (0) target = $region45
  $region44: #{tpu_custom_call.1} parent=0 // pred_region
    _
  $region45: #{tpu_custom_call.1} parent=0 // pred_fallthru
    _
  // Predicated region
  $region46: #{tpu_custom_call.1} parent=0 // pred_check
    _
  $region47: #{tpu_custom_call.1} parent=0 // pred_check_branch
    %183 = sbr.rel (0) target = $region49
  $region48: #{tpu_custom_call.1} parent=0 // pred_region
    _
  $region49: #{tpu_custom_call.1} parent=0 // pred_fallthru
    _

</llo_original>
